<compile_context>
chip_gen: v6e
topology: v6e:2x2x1
jax: 0.10.0
libtpu: 0.0.40
codegen_flags: <defaults>
</compile_context>

<pallas_src>
import functools

import jax
import jax.numpy as jnp
from jax.experimental import pallas as pl
from jax.experimental.pallas import tpu as pltpu

_EPS = 1e-5


# --------------------------------------------------------------------------- #
# Kernels
# --------------------------------------------------------------------------- #
def _linear_stats_kernel(x_ref, w1_ref, b1_ref,
                         h_ref, sum_ref, sq_ref,
                         *, batch, tile_b, needs_mask):
    """Phase 1: h = x @ W1 + b1 ; accumulate per-feature sum and sum-of-squares.

    grid = (hidden_tiles [parallel], batch_tiles [arbitrary/accumulated]).
    sum_ref / sq_ref blocks are revisited across the batch axis (accumulator).
    """
    i = pl.program_id(1)  # batch-tile index (innermost, accumulated axis)

    # x / W1 are already bf16; accumulate on the MXU in f32.
    h = jnp.dot(x_ref[...], w1_ref[...],
                preferred_element_type=jnp.float32) + b1_ref[...]
    h_ref[...] = h.astype(h_ref.dtype)  # bf16 intermediate -> half the HBM BW

    if needs_mask:
        # Mask batch-padding rows out of the statistics (B baked in statically).
        row = i * tile_b + jax.lax.broadcasted_iota(jnp.int32, h.shape, 0)
        hm = jnp.where(row < batch, h, 0.0)
    else:
        hm = h

    @pl.when(i == 0)
    def _():
        sum_ref[...] = jnp.zeros_like(sum_ref)
        sq_ref[...] = jnp.zeros_like(sq_ref)

    sum_ref[...] += jnp.sum(hm, axis=0, keepdims=True)
    sq_ref[...] += jnp.sum(hm * hm, axis=0, keepdims=True)


def _bn_relu_linear_kernel(h_ref, scale_ref, shift_ref, w2_ref, b2_ref, o_ref):
    """Phase 2: out = relu(h * scale + shift) @ W2 + b2 (folded BN affine)."""
    h = h_ref[...].astype(jnp.float32)
    a = jnp.maximum(h * scale_ref[...] + shift_ref[...], 0.0)
    o_ref[...] = (jnp.dot(a.astype(jnp.bfloat16), w2_ref[...],
                          preferred_element_type=jnp.float32)
                  + b2_ref[...]).astype(o_ref.dtype)


# --------------------------------------------------------------------------- #
# Wrapper
# --------------------------------------------------------------------------- #
def _round_up(n, m):
    return n + (-n) % m


def _pad_to(a, axis, target):
    pad = target - a.shape[axis]
    if pad == 0:
        return a
    widths = [(0, 0)] * a.ndim
    widths[axis] = (0, pad)
    return jnp.pad(a, widths)


def _choose_tile(padded_dim, candidates):
    for c in candidates:
        if padded_dim % c == 0:
            return min(c, padded_dim)
    return padded_dim


def _device_defaults():
    """(batch_tile, vmem_limit_bytes) derived per TPU generation."""
    try:
        kind = jax.devices()[0].device_kind.lower()
    except Exception:  # pragma: no cover
        kind = ""
    # v5e: 4x128x128 MXU -> 128 rows fill it; v6e/v7x: 2x256x256 -> 256 rows.
    tile_b = 128 if "v5" in kind else 256

    try:
        vmem_cap = int(pltpu.get_tpu_info().vmem_capacity_bytes)
    except Exception:  # pragma: no cover
        vmem_cap = 64 << 20  # v7x floor: be conservative if the query fails.
    # Leave headroom for Mosaic internal scratch; never exceed ~100 MiB.
    vmem_limit = min(int(vmem_cap * 0.75), 100 << 20)
    return tile_b, vmem_limit


def _projection_mlp_forward(x, w1, b1, gamma, beta, w2, b2, eps=_EPS):
    """x: (B, D_in). w1: (D_in, H). b1/gamma/beta: (H,) or (1, H).
    w2: (H, D_out). b2: (D_out,) or (1, D_out). Returns (B, D_out) f32."""
    x = x.astype(jnp.float32)
    b1 = b1.reshape(1, -1).astype(jnp.float32)
    gamma = gamma.reshape(1, -1).astype(jnp.float32)
    beta = beta.reshape(1, -1).astype(jnp.float32)
    b2 = b2.reshape(1, -1).astype(jnp.float32)

    B, D_in = x.shape
    H = w1.shape[1]
    D_out = w2.shape[1]

    tb_pref, vmem_limit = _device_defaults()

    # ---- padding: feature dims to multiples of 128 lanes, batch to tile ----
    # Batch tile is a multiple of 16 so bf16 blocks align to the packed
    # (16, 128) sublane/lane tile.
    TB = min(tb_pref, _round_up(B, 16))
    Bp = _round_up(B, TB)
    Dp_in = _round_up(D_in, 128)
    Hp = _round_up(H, 128)
    Dp_out = _round_up(D_out, 128)

    TH = _choose_tile(Hp, (512, 256, 128))   # W1 column tile (VMEM-bounded on v7x)
    TO = _choose_tile(Dp_out, (256, 128))    # output column tile (lane-dense)

    # Pre-cast matmul operands to bf16 once (same rounding as an in-kernel
    # cast, but halves their HBM DMA and removes per-tile VPU casts).
    xp = _pad_to(_pad_to(x, 1, Dp_in), 0, Bp).astype(jnp.bfloat16)
    w1p = _pad_to(_pad_to(w1.astype(jnp.float32), 0, Dp_in), 1, Hp).astype(jnp.bfloat16)
    b1p = _pad_to(b1, 1, Hp)
    gammap = _pad_to(gamma, 1, Hp)
    betap = _pad_to(beta, 1, Hp)
    w2p = _pad_to(_pad_to(w2.astype(jnp.float32), 0, Hp), 1, Dp_out).astype(jnp.bfloat16)
    b2p = _pad_to(b2, 1, Dp_out)

    # ---------------- phase 1: h = x @ W1 + b1 and batch statistics ----------
    grid1 = (Hp // TH, Bp // TB)
    kernel1 = functools.partial(_linear_stats_kernel,
                                batch=B, tile_b=TB, needs_mask=(Bp != B))
    h_buf, ssum, ssq = pl.pallas_call(
        kernel1,
        out_shape=(
            jax.ShapeDtypeStruct((Bp, Hp), jnp.bfloat16),  # h intermediate
            jax.ShapeDtypeStruct((1, Hp), jnp.float32),    # per-feature sum
            jax.ShapeDtypeStruct((1, Hp), jnp.float32),    # per-feature sum of squares
        ),
        grid_spec=pltpu.PrefetchScalarGridSpec(
            num_scalar_prefetch=0,
            grid=grid1,
            in_specs=[
                pl.BlockSpec((TB, Dp_in), lambda j, i: (i, 0)),   # x tile
                pl.BlockSpec((Dp_in, TH), lambda j, i: (0, j)),   # W1 tile (resident over batch)
                pl.BlockSpec((1, TH), lambda j, i: (0, j)),       # b1 tile
            ],
            out_specs=[
                pl.BlockSpec((TB, TH), lambda j, i: (i, j)),      # h tile
                pl.BlockSpec((1, TH), lambda j, i: (0, j)),       # sum accumulator
                pl.BlockSpec((1, TH), lambda j, i: (0, j)),       # sumsq accumulator
            ],
        ),
        compiler_params=pltpu.CompilerParams(
            dimension_semantics=("parallel", "arbitrary"),
            vmem_limit_bytes=vmem_limit,
        ),
    )(xp, w1p, b1p)

    # ---- tiny (1, H) glue: fold BN (train-mode biased var) + affine ---------
    inv_n = jnp.float32(1.0 / B)
    mean = ssum * inv_n
    var = jnp.maximum(ssq * inv_n - mean * mean, 0.0)
    scale = gammap * jax.lax.rsqrt(var + eps)
    shift = betap - mean * scale

    # ---------------- phase 2: relu(h*scale + shift) @ W2 + b2 ---------------
    grid2 = (Bp // TB, Dp_out // TO)
    outp = pl.pallas_call(
        _bn_relu_linear_kernel,
        out_shape=jax.ShapeDtypeStruct((Bp, Dp_out), jnp.float32),
        grid_spec=pltpu.PrefetchScalarGridSpec(
            num_scalar_prefetch=0,
            grid=grid2,
            in_specs=[
                pl.BlockSpec((TB, Hp), lambda i, j: (i, 0)),   # h tile (resident over out tiles)
                pl.BlockSpec((1, Hp), lambda i, j: (0, 0)),    # scale (resident)
                pl.BlockSpec((1, Hp), lambda i, j: (0, 0)),    # shift (resident)
                pl.BlockSpec((Hp, TO), lambda i, j: (0, j)),   # W2 tile (resident over batch)
                pl.BlockSpec((1, TO), lambda i, j: (0, j)),    # b2 tile
            ],
            out_specs=pl.BlockSpec((TB, TO), lambda i, j: (i, j)),
        ),
        compiler_params=pltpu.CompilerParams(
            dimension_semantics=("parallel", "parallel"),
            vmem_limit_bytes=vmem_limit,
        ),
    )(h_buf, scale, shift, w2p, b2p)

    return outp[:B, :D_out]


projection_mlp_forward = jax.jit(_projection_mlp_forward, static_argnames=("eps",))


# --------------------------------------------------------------------------- #
# References
# --------------------------------------------------------------------------- #
def ref_matched_precision(x, w1, b1, gamma, beta, w2, b2, eps=_EPS):
    """Same math & precision policy as the kernel (bf16 matmuls / bf16
    intermediate h, f32 statistics and BN arithmetic)."""
    h32 = jnp.dot(x.astype(jnp.bfloat16), w1.astype(jnp.bfloat16),
                  preferred_element_type=jnp.float32) + b1
    mean = jnp.mean(h32, axis=0, keepdims=True)
    var = jnp.maximum(jnp.mean(h32 * h32, axis=0, keepdims=True) - mean * mean, 0.0)
    scale = gamma * jax.lax.rsqrt(var + eps)
    shift = beta - mean * scale
    h = h32.astype(jnp.bfloat16).astype(jnp.float32)   # bf16 intermediate storage
    a = jnp.maximum(h * scale + shift, 0.0)
    return jnp.dot(a.astype(jnp.bfloat16), w2.astype(jnp.bfloat16),
                   preferred_element_type=jnp.float32) + b2


def ref_f32(x, w1, b1, gamma, beta, w2, b2, eps=_EPS):
    """Full-f32 reference matching the PyTorch module's train-mode forward."""
    h = x @ w1 + b1
    mean = jnp.mean(h, axis=0, keepdims=True)
    var = jnp.mean((h - mean) ** 2, axis=0, keepdims=True)
    h = (h - mean) / jnp.sqrt(var + eps)
    h = h * gamma + beta
    h = jnp.maximum(h, 0.0)
    return h @ w2 + b2


# --------------------------------------------------------------------------- #
# Demo / self-check
# --------------------------------------------------------------------------- #
if __name__ == "__main__":
    # Small shapes consistent with the module; deliberately non-multiples of
    # 16 / 128 to exercise the padding + stats-masking paths.
    B, D_IN, HID, D_OUT = 20, 96, 160, 80

    key = jax.random.PRNGKey(0)
    kx, kw1, kb1, kw2, kb2 = jax.random.split(key, 5)

    x = jax.random.normal(kx, (B, D_IN), dtype=jnp.float32)

    lim1 = 1.0 / (D_IN ** 0.5)
    w1 = jax.random.uniform(kw1, (D_IN, HID), minval=-lim1, maxval=lim1, dtype=jnp.float32)
    b1 = jax.random.uniform(kb1, (1, HID), minval=-lim1, maxval=lim1, dtype=jnp.float32)

    gamma = jnp.ones((1, HID), dtype=jnp.float32)   # nn.BatchNorm1d init
    beta = jnp.zeros((1, HID), dtype=jnp.float32)

    lim2 = 1.0 / (HID ** 0.5)
    w2 = jax.random.uniform(kw2, (HID, D_OUT), minval=-lim2, maxval=lim2, dtype=jnp.float32)
    b2 = jax.random.uniform(kb2, (1, D_OUT), minval=-lim2, maxval=lim2, dtype=jnp.float32)

    out = projection_mlp_forward(x, w1, b1, gamma, beta, w2, b2)
    out = jax.block_until_ready(out)
    assert out.shape == (B, D_OUT), out.shape

    # Tight check against a reference using the same bf16 precision policy.
    r_bf16 = ref_matched_precision(x, w1, b1, gamma, beta, w2, b2)
    assert jnp.allclose(out, r_bf16, atol=3e-3, rtol=3e-3), "mismatch vs matched-precision reference"

    # Loose semantic check against the full-f32 PyTorch-equivalent forward.
    r_f32 = ref_f32(x, w1, b1, gamma, beta, w2, b2)
    assert jnp.allclose(out, r_f32, atol=1e-1, rtol=1e-1), "mismatch vs f32 reference"

    print("KERNEL_OK")
</pallas_src>

<mosaic_0001>
module attributes {stable_mosaic.version = 11 : i64} {
  func.func @_linear_stats_kernel(%arg0: i32, %arg1: i32, %arg2: memref<32x128xbf16, #tpu.memory_space<vmem>>, %arg3: memref<128x256xbf16, #tpu.memory_space<vmem>>, %arg4: memref<1x256xf32, #tpu.memory_space<vmem>>, %arg5: memref<32x256xbf16, #tpu.memory_space<vmem>>, %arg6: memref<1x256xf32, #tpu.memory_space<vmem>>, %arg7: memref<1x256xf32, #tpu.memory_space<vmem>>) attributes {dimension_semantics = [#tpu.dimension_semantics<parallel>, #tpu.dimension_semantics<arbitrary>], iteration_bounds = array<i64: 1, 1>, scalar_prefetch = 0 : i64, scratch_operands = 0 : i64, tpu.core_type = #tpu.core_type<tc>, window_params = [{transform_indices = @transform_0, window_bounds = array<i64: 32, 128>}, {transform_indices = @transform_1, window_bounds = array<i64: 128, 256>}, {transform_indices = @transform_2, window_bounds = array<i64: 1, 256>}, {transform_indices = @transform_3, window_bounds = array<i64: 32, 256>}, {transform_indices = @transform_4, window_bounds = array<i64: 1, 256>}, {transform_indices = @transform_5, window_bounds = array<i64: 1, 256>}]} {
    %c0 = arith.constant 0 : index
    %c0_0 = arith.constant 0 : index
    %0 = vector.load %arg2[%c0, %c0_0] : memref<32x128xbf16, #tpu.memory_space<vmem>>, vector<32x128xbf16>
    %c0_1 = arith.constant 0 : index
    %c0_2 = arith.constant 0 : index
    %1 = vector.load %arg3[%c0_1, %c0_2] : memref<128x256xbf16, #tpu.memory_space<vmem>>, vector<128x256xbf16>
    %cst = arith.constant dense<0.000000e+00> : vector<32x256xf32>
    %2 = tpu.matmul %0, %1, %cst {dimension_numbers = #tpu.dot_dimension_numbers<[1], [0], [0], [1], [0, 0, 1, 1], [], []>} : vector<32x128xbf16>, vector<128x256xbf16>, vector<32x256xf32> -> vector<32x256xf32>
    %c0_3 = arith.constant 0 : index
    %c0_4 = arith.constant 0 : index
    %3 = vector.load %arg4[%c0_3, %c0_4] : memref<1x256xf32, #tpu.memory_space<vmem>>, vector<1x256xf32>
    %4 = vector.broadcast %3 : vector<1x256xf32> to vector<32x256xf32>
    %5 = arith.addf %2, %4 : vector<32x256xf32>
    %6 = arith.truncf %5 : vector<32x256xf32> to vector<32x256xbf16>
    %c0_5 = arith.constant 0 : index
    %c0_6 = arith.constant 0 : index
    %7 = vector.load %arg5[%c0_5, %c0_6] : memref<32x256xbf16, #tpu.memory_space<vmem>>, vector<32x256xbf16>
    tpu.vector_store %arg5[%c0_5, %c0_6], %6 {strides = array<i32>} : memref<32x256xbf16, #tpu.memory_space<vmem>>, vector<32x256xbf16>,
    %c32_i32 = arith.constant 32 : i32
    %8 = arith.muli %arg1, %c32_i32 : i32
    %9 = tpu.iota {dimensions = array<i32: 0>} : vector<32x256xi32>
    %10 = vector.broadcast %8 : i32 to vector<32x256xi32>
    %11 = arith.addi %10, %9 : vector<32x256xi32>
    %c20_i32 = arith.constant 20 : i32
    %12 = vector.broadcast %c20_i32 : i32 to vector<32x256xi32>
    %13 = arith.cmpi slt, %11, %12 : vector<32x256xi32>
    %cst_7 = arith.constant 0.000000e+00 : f32
    %14 = vector.broadcast %cst_7 : f32 to vector<32x256xf32>
    %15 = arith.select %13, %5, %14 : vector<32x256xi1>, vector<32x256xf32>
    %c0_i32 = arith.constant 0 : i32
    %16 = arith.cmpi eq, %arg1, %c0_i32 : i32
    %17 = arith.extui %16 : i1 to i32
    %c0_i32_8 = arith.constant 0 : i32
    %18 = arith.cmpi ne, %17, %c0_i32_8 : i32
    scf.if %18 {
      %cst_19 = arith.constant 0.000000e+00 : f32
      %30 = vector.broadcast %cst_19 : f32 to vector<1x256xf32>
      %c0_20 = arith.constant 0 : index
      %c0_21 = arith.constant 0 : index
      %31 = vector.load %arg6[%c0_20, %c0_21] : memref<1x256xf32, #tpu.memory_space<vmem>>, vector<1x256xf32>
      tpu.vector_store %arg6[%c0_20, %c0_21], %30 {strides = array<i32>} : memref<1x256xf32, #tpu.memory_space<vmem>>, vector<1x256xf32>,
      %cst_22 = arith.constant 0.000000e+00 : f32
      %32 = vector.broadcast %cst_22 : f32 to vector<1x256xf32>
      %c0_23 = arith.constant 0 : index
      %c0_24 = arith.constant 0 : index
      %33 = vector.load %arg7[%c0_23, %c0_24] : memref<1x256xf32, #tpu.memory_space<vmem>>, vector<1x256xf32>
      tpu.vector_store %arg7[%c0_23, %c0_24], %32 {strides = array<i32>} : memref<1x256xf32, #tpu.memory_space<vmem>>, vector<1x256xf32>,
    } else {
    }
    %c0_9 = arith.constant 0 : index
    %c0_10 = arith.constant 0 : index
    %19 = vector.load %arg6[%c0_9, %c0_10] : memref<1x256xf32, #tpu.memory_space<vmem>>, vector<1x256xf32>
    %cst_11 = arith.constant dense<0.000000e+00> : vector<256xf32>
    %20 = vector.multi_reduction <add>, %15, %cst_11 [0] : vector<32x256xf32> to vector<256xf32>
    %21 = vector.shape_cast %20 : vector<256xf32> to vector<1x256xf32>
    %22 = arith.addf %19, %21 : vector<1x256xf32>
    %c0_12 = arith.constant 0 : index
    %c0_13 = arith.constant 0 : index
    %23 = vector.load %arg6[%c0_12, %c0_13] : memref<1x256xf32, #tpu.memory_space<vmem>>, vector<1x256xf32>
    tpu.vector_store %arg6[%c0_12, %c0_13], %22 {strides = array<i32>} : memref<1x256xf32, #tpu.memory_space<vmem>>, vector<1x256xf32>,
    %c0_14 = arith.constant 0 : index
    %c0_15 = arith.constant 0 : index
    %24 = vector.load %arg7[%c0_14, %c0_15] : memref<1x256xf32, #tpu.memory_space<vmem>>, vector<1x256xf32>
    %25 = arith.mulf %15, %15 : vector<32x256xf32>
    %cst_16 = arith.constant dense<0.000000e+00> : vector<256xf32>
    %26 = vector.multi_reduction <add>, %25, %cst_16 [0] : vector<32x256xf32> to vector<256xf32>
    %27 = vector.shape_cast %26 : vector<256xf32> to vector<1x256xf32>
    %28 = arith.addf %24, %27 : vector<1x256xf32>
    %c0_17 = arith.constant 0 : index
    %c0_18 = arith.constant 0 : index
    %29 = vector.load %arg7[%c0_17, %c0_18] : memref<1x256xf32, #tpu.memory_space<vmem>>, vector<1x256xf32>
    tpu.vector_store %arg7[%c0_17, %c0_18], %28 {strides = array<i32>} : memref<1x256xf32, #tpu.memory_space<vmem>>, vector<1x256xf32>,
    return
  }
  func.func @transform_0(%arg0: i32, %arg1: i32) -> (i32, i32) {
    %c0_i32 = arith.constant 0 : i32
    %c0_i32_0 = arith.constant 0 : i32
    return %arg1, %c0_i32 : i32, i32
  }
  func.func @transform_1(%arg0: i32, %arg1: i32) -> (i32, i32) {
    %c0_i32 = arith.constant 0 : i32
    %c0_i32_0 = arith.constant 0 : i32
    return %c0_i32, %arg0 : i32, i32
  }
  func.func @transform_2(%arg0: i32, %arg1: i32) -> (i32, i32) {
    %c0_i32 = arith.constant 0 : i32
    %c0_i32_0 = arith.constant 0 : i32
    return %c0_i32, %arg0 : i32, i32
  }
  func.func @transform_3(%arg0: i32, %arg1: i32) -> (i32, i32) {
    %c0_i32 = arith.constant 0 : i32
    return %arg1, %arg0 : i32, i32
  }
  func.func @transform_4(%arg0: i32, %arg1: i32) -> (i32, i32) {
    %c0_i32 = arith.constant 0 : i32
    %c0_i32_0 = arith.constant 0 : i32
    return %c0_i32, %arg0 : i32, i32
  }
  func.func @transform_5(%arg0: i32, %arg1: i32) -> (i32, i32) {
    %c0_i32 = arith.constant 0 : i32
    %c0_i32_0 = arith.constant 0 : i32
    return %c0_i32, %arg0 : i32, i32
  }
}

module attributes {stable_mosaic.version = 11 : i64} {
  func.func @_bn_relu_linear_kernel(%arg0: i32, %arg1: i32, %arg2: memref<32x256xbf16, #tpu.memory_space<vmem>>, %arg3: memref<1x256xf32, #tpu.memory_space<vmem>>, %arg4: memref<1x256xf32, #tpu.memory_space<vmem>>, %arg5: memref<256x128xbf16, #tpu.memory_space<vmem>>, %arg6: memref<1x128xf32, #tpu.memory_space<vmem>>, %arg7: memref<32x128xf32, #tpu.memory_space<vmem>>) attributes {dimension_semantics = [#tpu.dimension_semantics<parallel>, #tpu.dimension_semantics<parallel>], iteration_bounds = array<i64: 1, 1>, scalar_prefetch = 0 : i64, scratch_operands = 0 : i64, tpu.core_type = #tpu.core_type<tc>, window_params = [{transform_indices = @transform_0, window_bounds = array<i64: 32, 256>}, {pipeline_mode = #tpu.pipeline_mode<synchronous>, transform_indices = @transform_1, window_bounds = array<i64: 1, 256>}, {pipeline_mode = #tpu.pipeline_mode<synchronous>, transform_indices = @transform_2, window_bounds = array<i64: 1, 256>}, {transform_indices = @transform_3, window_bounds = array<i64: 256, 128>}, {transform_indices = @transform_4, window_bounds = array<i64: 1, 128>}, {transform_indices = @transform_5, window_bounds = array<i64: 32, 128>}]} {
    %c0 = arith.constant 0 : index
    %c0_0 = arith.constant 0 : index
    %0 = vector.load %arg2[%c0, %c0_0] : memref<32x256xbf16, #tpu.memory_space<vmem>>, vector<32x256xbf16>
    %1 = arith.extf %0 : vector<32x256xbf16> to vector<32x256xf32>
    %c0_1 = arith.constant 0 : index
    %c0_2 = arith.constant 0 : index
    %2 = vector.load %arg3[%c0_1, %c0_2] : memref<1x256xf32, #tpu.memory_space<vmem>>, vector<1x256xf32>
    %3 = vector.broadcast %2 : vector<1x256xf32> to vector<32x256xf32>
    %4 = arith.mulf %1, %3 : vector<32x256xf32>
    %c0_3 = arith.constant 0 : index
    %c0_4 = arith.constant 0 : index
    %5 = vector.load %arg4[%c0_3, %c0_4] : memref<1x256xf32, #tpu.memory_space<vmem>>, vector<1x256xf32>
    %6 = vector.broadcast %5 : vector<1x256xf32> to vector<32x256xf32>
    %7 = arith.addf %4, %6 : vector<32x256xf32>
    %cst = arith.constant 0.000000e+00 : f32
    %8 = vector.broadcast %cst : f32 to vector<32x256xf32>
    %9 = arith.maximumf %7, %8 : vector<32x256xf32>
    %10 = arith.truncf %9 : vector<32x256xf32> to vector<32x256xbf16>
    %c0_5 = arith.constant 0 : index
    %c0_6 = arith.constant 0 : index
    %11 = vector.load %arg5[%c0_5, %c0_6] : memref<256x128xbf16, #tpu.memory_space<vmem>>, vector<256x128xbf16>
    %cst_7 = arith.constant dense<0.000000e+00> : vector<32x128xf32>
    %12 = tpu.matmul %10, %11, %cst_7 {dimension_numbers = #tpu.dot_dimension_numbers<[1], [0], [0], [1], [0, 0, 1, 1], [], []>} : vector<32x256xbf16>, vector<256x128xbf16>, vector<32x128xf32> -> vector<32x128xf32>
    %c0_8 = arith.constant 0 : index
    %c0_9 = arith.constant 0 : index
    %13 = vector.load %arg6[%c0_8, %c0_9] : memref<1x128xf32, #tpu.memory_space<vmem>>, vector<1x128xf32>
    %14 = vector.broadcast %13 : vector<1x128xf32> to vector<32x128xf32>
    %15 = arith.addf %12, %14 : vector<32x128xf32>
    %c0_10 = arith.constant 0 : index
    %c0_11 = arith.constant 0 : index
    %16 = vector.load %arg7[%c0_10, %c0_11] : memref<32x128xf32, #tpu.memory_space<vmem>>, vector<32x128xf32>
    tpu.vector_store %arg7[%c0_10, %c0_11], %15 {strides = array<i32>} : memref<32x128xf32, #tpu.memory_space<vmem>>, vector<32x128xf32>,
    return
  }
  func.func @transform_0(%arg0: i32, %arg1: i32) -> (i32, i32) {
    %c0_i32 = arith.constant 0 : i32
    %c0_i32_0 = arith.constant 0 : i32
    return %arg0, %c0_i32 : i32, i32
  }
  func.func @transform_1(%arg0: i32, %arg1: i32) -> (i32, i32) {
    %c0_i32 = arith.constant 0 : i32
    %c0_i32_0 = arith.constant 0 : i32
    %c0_i32_1 = arith.constant 0 : i32
    return %c0_i32, %c0_i32_0 : i32, i32
  }
  func.func @transform_2(%arg0: i32, %arg1: i32) -> (i32, i32) {
    %c0_i32 = arith.constant 0 : i32
    %c0_i32_0 = arith.constant 0 : i32
    %c0_i32_1 = arith.constant 0 : i32
    return %c0_i32, %c0_i32_0 : i32, i32
  }
  func.func @transform_3(%arg0: i32, %arg1: i32) -> (i32, i32) {
    %c0_i32 = arith.constant 0 : i32
    %c0_i32_0 = arith.constant 0 : i32
    return %c0_i32, %arg1 : i32, i32
  }
  func.func @transform_4(%arg0: i32, %arg1: i32) -> (i32, i32) {
    %c0_i32 = arith.constant 0 : i32
    %c0_i32_0 = arith.constant 0 : i32
    return %c0_i32, %arg1 : i32, i32
  }
  func.func @transform_5(%arg0: i32, %arg1: i32) -> (i32, i32) {
    %c0_i32 = arith.constant 0 : i32
    return %arg0, %arg1 : i32, i32
  }
}

</mosaic_0001>

<llo_original>
// kernel: _projection_mlp_forward.2
$region0: #{_projection_mlp_forward.2}
  #allocation0 [shape = 'u32[]', space=smem, size = 0x4, offset = 0x4, fixed_abs, tag = 'smem constant byte address 0x4 - core index']
  #allocation1 [shape = 'u32[144,128]{1,0:T(1,128)}', space=vmem, size = 0x12000, scoped, tag = 'internal scratch']
  %s0 = inlined_call_operand.vmem [shape: bf16[32,128], index: 0, kind: input, shape index: {}]
  %s1 = inlined_call_operand.vmem [shape: bf16[128,256], index: 1, kind: input, shape index: {}]
  %s2 = inlined_call_operand.vmem [shape: f32[1,256], index: 2, kind: input, shape index: {}]
  %s3 = inlined_call_operand.vmem [shape: bf16[32,256], index: 3, kind: output, shape index: {0}]
  %s4 = inlined_call_operand.vmem [shape: f32[1,256], index: 4, kind: output, shape index: {1}]
  %s5 = inlined_call_operand.vmem [shape: f32[1,256], index: 5, kind: output, shape index: {2}]
  %6 = xla_tuple %s3, %s4, %s5
  %s7 = sld [smem:[#allocation0]]
  $region42: #{_projection_mlp_forward.2} parent=0
    _
  %s9 = ssub.s32 1, %s7
  %s10 = scalar_select 0, %s9, %s7
  // Predicated region
  $region2: #{_projection_mlp_forward.2} parent=0 // pred_check
    _
  $region3: #{_projection_mlp_forward.2} parent=0 // pred_check_branch
    %12 = sbr.rel (0) target = $region5
  $region4: #{_projection_mlp_forward.2} parent=0 // pred_region
    _
  $region5: #{_projection_mlp_forward.2} parent=0 // pred_fallthru
    _
  // Predicated region
  $region6: #{_projection_mlp_forward.2} parent=0 // pred_check
    _
  $region7: #{_projection_mlp_forward.2} parent=0 // pred_check_branch
    %14 = sbr.rel (0) target = $region9
  $region8: #{_projection_mlp_forward.2} parent=0 // pred_region
    _
  $region9: #{_projection_mlp_forward.2} parent=0 // pred_fallthru
    _
  // Predicated region
  $region10: #{_projection_mlp_forward.2} parent=0 // pred_check
    _
  $region11: #{_projection_mlp_forward.2} parent=0 // pred_check_branch
    %16 = sbr.rel (0) target = $region13
  $region12: #{_projection_mlp_forward.2} parent=0 // pred_region
    _
  $region13: #{_projection_mlp_forward.2} parent=0 // pred_fallthru
    _
  %v18 = vld [vmem:[%s0] sm:$0xf]
  %v19 = vld [vmem:[%s0 + $0x4] sm:$0xf]
  %v20 = vld [vmem:[%s0 + $0x8] sm:$0xf]
  %v21 = vld [vmem:[%s0 + $0xc] sm:$0xf]
  %v22 = vld [vmem:[%s1] sm:$0xff]
  %v23 = vld [vmem:[%s1 + $0x8] sm:$0xff]
  %v24 = vld [vmem:[%s1 + $0x10] sm:$0xff]
  %v25 = vld [vmem:[%s1 + $0x18] sm:$0xff]
  %v26 = vld [vmem:[%s1 + $0x20] sm:$0xff]
  %v27 = vld [vmem:[%s1 + $0x28] sm:$0xff]
  %v28 = vld [vmem:[%s1 + $0x30] sm:$0xff]
  %v29 = vld [vmem:[%s1 + $0x38] sm:$0xff]
  %v30 = vld [vmem:[%s1 + $0x40] sm:$0xff]
  %v31 = vld [vmem:[%s1 + $0x48] sm:$0xff]
  %v32 = vld [vmem:[%s1 + $0x50] sm:$0xff]
  %v33 = vld [vmem:[%s1 + $0x58] sm:$0xff]
  %v34 = vld [vmem:[%s1 + $0x60] sm:$0xff]
  %v35 = vld [vmem:[%s1 + $0x68] sm:$0xff]
  %v36 = vld [vmem:[%s1 + $0x70] sm:$0xff]
  %v37 = vld [vmem:[%s1 + $0x78] sm:$0xff]
  %v38 = vld [vmem:[%s2] sm:$0x3]
  %v40 = vlaneseq
  %v41 = vshrl.u32 %v40, 7
  %v42 = vsub.s32 0, %v41
  %v43 = vrot.slane %v38, %v42
  %v44 = vlaneseq
  %v45 = vshrl.u32 %v44, 7
  %v46 = vsub.s32 1, %v45
  %v47 = vrot.slane %v38, %v46
  %v54 = vunpack.c.l.b16 %v18
  %v55 = vunpack.c.l.b16 %v19
  %v56 = vunpack.c.l.b16 %v20
  %v57 = vunpack.c.l.b16 %v21
  %v58 = vpack.c.b16 %v55, %v54
  %v59 = vpack.c.b16 %v57, %v56
  %v78 = vunpack.c.l.b16 %v22
  %v79 = vunpack.c.h.b16 %v22
  %v80 = vunpack.c.l.b16 %v23
  %v81 = vunpack.c.h.b16 %v23
  %v82 = vunpack.c.l.b16 %v24
  %v83 = vunpack.c.h.b16 %v24
  %v84 = vunpack.c.l.b16 %v25
  %v85 = vunpack.c.h.b16 %v25
  %v86 = vunpack.c.l.b16 %v26
  %v87 = vunpack.c.h.b16 %v26
  %v88 = vunpack.c.l.b16 %v27
  %v89 = vunpack.c.h.b16 %v27
  %v90 = vunpack.c.l.b16 %v28
  %v91 = vunpack.c.h.b16 %v28
  %v92 = vunpack.c.l.b16 %v29
  %v93 = vunpack.c.h.b16 %v29
  %v94 = vunpack.c.l.b16 %v30
  %v95 = vunpack.c.h.b16 %v30
  %v96 = vunpack.c.l.b16 %v31
  %v97 = vunpack.c.h.b16 %v31
  %v98 = vunpack.c.l.b16 %v32
  %v99 = vunpack.c.h.b16 %v32
  %v100 = vunpack.c.l.b16 %v33
  %v101 = vunpack.c.h.b16 %v33
  %v102 = vunpack.c.l.b16 %v34
  %v103 = vunpack.c.h.b16 %v34
  %v104 = vunpack.c.l.b16 %v35
  %v105 = vunpack.c.h.b16 %v35
  %v106 = vunpack.c.l.b16 %v36
  %v107 = vunpack.c.h.b16 %v36
  %v108 = vunpack.c.l.b16 %v37
  %v109 = vunpack.c.h.b16 %v37
  %v110 = vpack.c.b16 %v80, %v78
  %v111 = vpack.c.b16 %v81, %v79
  %v112 = vpack.c.b16 %v84, %v82
  %v113 = vpack.c.b16 %v85, %v83
  %v114 = vpack.c.b16 %v88, %v86
  %v115 = vpack.c.b16 %v89, %v87
  %v116 = vpack.c.b16 %v92, %v90
  %v117 = vpack.c.b16 %v93, %v91
  %v118 = vpack.c.b16 %v96, %v94
  %v119 = vpack.c.b16 %v97, %v95
  %v120 = vpack.c.b16 %v100, %v98
  %v121 = vpack.c.b16 %v101, %v99
  %v122 = vpack.c.b16 %v104, %v102
  %v123 = vpack.c.b16 %v105, %v103
  %v124 = vpack.c.b16 %v108, %v106
  %v125 = vpack.c.b16 %v109, %v107
  %142 = vmatprep.subr.bf16.mxu0 %v125
  %143 = vmatpush1.bf16.msra.mxu0 %v124
  %144 = vmatprep.subr.bf16.mxu0 %v123
  %145 = vmatpush1.bf16.msra.mxu0 %v122
  %146 = vmatprep.subr.bf16.mxu0 %v121
  %147 = vmatpush1.bf16.msra.mxu0 %v120
  %148 = vmatprep.subr.bf16.mxu0 %v119
  %149 = vmatpush1.bf16.msra.mxu0 %v118
  %150 = vmatprep.subr.bf16.mxu0 %v117
  %151 = vmatpush1.bf16.msra.mxu0 %v116
  %152 = vmatprep.subr.bf16.mxu0 %v115
  %153 = vmatpush1.bf16.msra.mxu0 %v114
  %154 = vmatprep.subr.bf16.mxu0 %v113
  %155 = vmatpush1.bf16.msra.mxu0 %v112
  %156 = vmatprep.subr.bf16.mxu0 %v111
  %157 = vmatpush1.bf16.msra.mxu0 %v110
  %158 = vmatprep.subr.bf16.mxu0 0
  %159 = vmatpush2.bf16.msra.mxu0 0
  %160 = vmatprep.subr.bf16.mxu0 0
  %161 = vmatpush2.bf16.msra.mxu0 0
  %162 = vmatprep.subr.bf16.mxu0 0
  %163 = vmatpush2.bf16.msra.mxu0 0
  %164 = vmatprep.subr.bf16.mxu0 0
  %165 = vmatpush2.bf16.msra.mxu0 0
  %166 = vmatprep.subr.bf16.mxu0 0
  %167 = vmatpush2.bf16.msra.mxu0 0
  %168 = vmatprep.subr.bf16.mxu0 0
  %169 = vmatpush2.bf16.msra.mxu0 0
  %170 = vmatprep.subr.bf16.mxu0 0
  %171 = vmatpush2.bf16.msra.mxu0 0
  %172 = vmatprep.subr.bf16.mxu0 0
  %173 = vmatpush2.bf16.msra.mxu0 0
  %174 = vmatprep.mubr.bf16.mxu0 0
  %175 = vmatmul.mubr.bf16.gmra.mxu0 %v58
  %v176 = vpop.f32.mrf.mxu0
  %v177 = vadd.f32 %v43, %v176
  %v178 = vpop.f32.mrf.mxu0
  %v179 = vadd.f32 %v47, %v178
  %v180 = vpop.f32.mrf.mxu0
  %v181 = vadd.f32 %v43, %v180
  %v182 = vpop.f32.mrf.mxu0
  %v183 = vadd.f32 %v47, %v182
  %184 = vmatprep.mubr.bf16.mxu0 0
  %185 = vmatmul.mubr.bf16.gmra.mxu0 %v59
  %v186 = vpop.f32.mrf.mxu0
  %v187 = vadd.f32 %v43, %v186
  %v188 = vpop.f32.mrf.mxu0
  %v189 = vadd.f32 %v47, %v188
  %v190 = vpop.f32.mrf.mxu0
  %v191 = vadd.f32 %v43, %v190
  %v192 = vpop.f32.mrf.mxu0
  %v193 = vadd.f32 %v47, %v192
  %194 = vdwg.mxu0
  %v195 = vpack.c.bf16 %v181, %v177
  %v196 = vpack.c.bf16 %v183, %v179
  %v197 = vpack.c.bf16 %v191, %v187
  %v198 = vpack.c.bf16 %v193, %v189
  %v203 = vunpack.c.l.b16 %v195
  %v204 = vunpack.c.l.b16 %v196
  %v205 = vunpack.c.h.b16 %v195
  %v206 = vunpack.c.h.b16 %v196
  %v207 = vunpack.c.l.b16 %v197
  %v208 = vunpack.c.l.b16 %v198
  %v209 = vunpack.c.h.b16 %v197
  %v210 = vunpack.c.h.b16 %v198
  %v211 = vpack.c.b16 %v204, %v203
  %v212 = vpack.c.b16 %v206, %v205
  %v213 = vpack.c.b16 %v208, %v207
  %v214 = vpack.c.b16 %v210, %v209
  %219 = vst [vmem:[%s3] sm:$0xff] %v211
  %220 = vst [vmem:[%s3 + $0x8] sm:$0xff] %v212
  %221 = vst [vmem:[%s3 + $0x10] sm:$0xff] %v213
  %222 = vst [vmem:[%s3 + $0x18] sm:$0xff] %v214
  %s223 = smul.u32 0, 32
  %v224 = vlaneseq
  %v225 = vshrl.u32 %v224, 7
  %v226 = vadd.s32 %v225, 8
  %v227 = vadd.s32 %v225, 16
  %v228 = vadd.s32 %v225, 24
  %v229 = vstv %s223
  %v230 = vadd.s32 %v229, %v225
  %v231 = vadd.s32 %v229, %v226
  %v232 = vadd.s32 %v229, %v227
  %v233 = vadd.s32 %v229, %v228
  %vm234 = vcmp.lt.s32.totalorder %v230, 20
  %vm235 = vcmp.lt.s32.totalorder %v231, 20
  %vm236 = vcmp.lt.s32.totalorder %v232, 20
  %vm237 = vcmp.lt.s32.totalorder %v233, 20
  %v238 = vsel %vm234, %v177, 0.0
  %v239 = vsel %vm234, %v179, 0.0
  %v240 = vsel %vm235, %v181, 0.0
  %v241 = vsel %vm235, %v183, 0.0
  %v242 = vsel %vm236, %v187, 0.0
  %v243 = vsel %vm236, %v189, 0.0
  %v244 = vsel %vm237, %v191, 0.0
  %v245 = vsel %vm237, %v193, 0.0
  %p246 = scmp.eq.s32.totalorder 0, 0
  // Predicated region
  $region14: #{_projection_mlp_forward.2} parent=0 // pred_check
    %p247 = pneg %p246
  $region15: #{_projection_mlp_forward.2} parent=0 // pred_check_branch
    %249 = sbr.rel (%p247) target = $region17
  $region16: #{_projection_mlp_forward.2} parent=0 // pred_region
    %v250 = vlaneseq
    %vm251 = vcmp.ge.s32.totalorder %v250, 0
    %vm252 = vcmp.lt.s32.totalorder %v250, 256
    %vm253 = vmand %vm251, %vm252
    %254 = vst.msk [vmem:[%s4] sm:$0x3] %vm253, 0.0
    %255 = vst.msk [vmem:[%s5] sm:$0x3] %vm253, 0.0
  $region17: #{_projection_mlp_forward.2} parent=0 // pred_fallthru
    _
  %v256 = vld [vmem:[%s4] sm:$0x3]
  %v257 = vadd.f32 %v238, %v240
  %v258 = vadd.f32 %v257, %v242
  %v259 = vadd.f32 %v258, %v244
  %v260 = vrot.slane %v259, 4
  %v261 = vadd.f32 %v259, %v260
  %v262 = vrot.slane %v261, 2
  %v263 = vadd.f32 %v261, %v262
  %v264 = vrot.slane %v263, 1
  %v265 = vadd.f32 %v263, %v264
  %v266 = vadd.f32 %v239, %v241
  %v267 = vadd.f32 %v266, %v243
  %v268 = vadd.f32 %v267, %v245
  %v269 = vrot.slane %v268, 4
  %v270 = vadd.f32 %v268, %v269
  %v271 = vrot.slane %v270, 2
  %v272 = vadd.f32 %v270, %v271
  %v273 = vrot.slane %v272, 1
  %v274 = vadd.f32 %v272, %v273
  %v277 = vcombine.low %v265, %v274
  %v279 = vunpack.c.l.s4 1966171168
  %v280 = vunpack.c.0.s8 %v279
  %v281 = vlaneseq
  %v282 = vshrl.u32 %v281, 7
  %v283 = vsub.s32 %v280, %v282
  %v284 = vrot.slane %v277, %v283
  %v286 = vunpack.c.l.s4 1966171168
  %v287 = vunpack.c.0.s8 %v286
  %v288 = vlaneseq
  %v289 = vshrl.u32 %v288, 7
  %v290 = vsub.s32 %v287, %v289
  %v291 = vrot.slane %v284, %v290
  %v293 = vadd.f32 %v256, %v291
  %v294 = vlaneseq
  %vm295 = vcmp.ge.s32.totalorder %v294, 0
  %vm296 = vcmp.lt.s32.totalorder %v294, 256
  %vm297 = vmand %vm295, %vm296
  %298 = vst.msk [vmem:[%s4] sm:$0x3] %vm297, %v293
  %v299 = vld [vmem:[%s5] sm:$0x3]
  %v300 = vmul.f32 %v238, %v238
  %v301 = vmul.f32 %v239, %v239
  %v302 = vmul.f32 %v240, %v240
  %v303 = vmul.f32 %v241, %v241
  %v304 = vmul.f32 %v242, %v242
  %v305 = vmul.f32 %v243, %v243
  %v306 = vmul.f32 %v244, %v244
  %v307 = vmul.f32 %v245, %v245
  %v308 = vadd.f32 %v300, %v302
  %v309 = vadd.f32 %v308, %v304
  %v310 = vadd.f32 %v309, %v306
  %v311 = vrot.slane %v310, 4
  %v312 = vadd.f32 %v310, %v311
  %v313 = vrot.slane %v312, 2
  %v314 = vadd.f32 %v312, %v313
  %v315 = vrot.slane %v314, 1
  %v316 = vadd.f32 %v314, %v315
  %v317 = vadd.f32 %v301, %v303
  %v318 = vadd.f32 %v317, %v305
  %v319 = vadd.f32 %v318, %v307
  %v320 = vrot.slane %v319, 4
  %v321 = vadd.f32 %v319, %v320
  %v322 = vrot.slane %v321, 2
  %v323 = vadd.f32 %v321, %v322
  %v324 = vrot.slane %v323, 1
  %v325 = vadd.f32 %v323, %v324
  %v328 = vcombine.low %v316, %v325
  %v330 = vunpack.c.l.s4 1966171168
  %v331 = vunpack.c.0.s8 %v330
  %v332 = vlaneseq
  %v333 = vshrl.u32 %v332, 7
  %v334 = vsub.s32 %v331, %v333
  %v335 = vrot.slane %v328, %v334
  %v337 = vunpack.c.l.s4 1966171168
  %v338 = vunpack.c.0.s8 %v337
  %v339 = vlaneseq
  %v340 = vshrl.u32 %v339, 7
  %v341 = vsub.s32 %v338, %v340
  %v342 = vrot.slane %v335, %v341
  %v344 = vadd.f32 %v299, %v342
  %345 = vst.msk [vmem:[%s5] sm:$0x3] %vm297, %v344
  // Predicated region
  $region18: #{_projection_mlp_forward.2} parent=0 // pred_check
    _
  $region19: #{_projection_mlp_forward.2} parent=0 // pred_check_branch
    %347 = sbr.rel (0) target = $region21
  $region20: #{_projection_mlp_forward.2} parent=0 // pred_region
    _
  $region21: #{_projection_mlp_forward.2} parent=0 // pred_fallthru
    _
  // Predicated region
  $region22: #{_projection_mlp_forward.2} parent=0 // pred_check
    _
  $region23: #{_projection_mlp_forward.2} parent=0 // pred_check_branch
    %349 = sbr.rel (0) target = $region25
  $region24: #{_projection_mlp_forward.2} parent=0 // pred_region
    _
  $region25: #{_projection_mlp_forward.2} parent=0 // pred_fallthru
    _
  // Predicated region
  $region26: #{_projection_mlp_forward.2} parent=0 // pred_check
    _
  $region27: #{_projection_mlp_forward.2} parent=0 // pred_check_branch
    %351 = sbr.rel (0) target = $region29
  $region28: #{_projection_mlp_forward.2} parent=0 // pred_region
    _
  $region29: #{_projection_mlp_forward.2} parent=0 // pred_fallthru
    _
  // Predicated region
  $region30: #{_projection_mlp_forward.2} parent=0 // pred_check
    _
  $region31: #{_projection_mlp_forward.2} parent=0 // pred_check_branch
    %353 = sbr.rel (0) target = $region33
  $region32: #{_projection_mlp_forward.2} parent=0 // pred_region
    _
  $region33: #{_projection_mlp_forward.2} parent=0 // pred_fallthru
    _
  // Predicated region
  $region34: #{_projection_mlp_forward.2} parent=0 // pred_check
    _
  $region35: #{_projection_mlp_forward.2} parent=0 // pred_check_branch
    %355 = sbr.rel (0) target = $region37
  $region36: #{_projection_mlp_forward.2} parent=0 // pred_region
    _
  $region37: #{_projection_mlp_forward.2} parent=0 // pred_fallthru
    _
  // Predicated region
  $region38: #{_projection_mlp_forward.2} parent=0 // pred_check
    _
  $region39: #{_projection_mlp_forward.2} parent=0 // pred_check_branch
    %357 = sbr.rel (0) target = $region41
  $region40: #{_projection_mlp_forward.2} parent=0 // pred_region
    _
  $region41: #{_projection_mlp_forward.2} parent=0 // pred_fallthru
    _

// kernel: _projection_mlp_forward.3
$region0: #{_projection_mlp_forward.3}
  #allocation0 [shape = 'u32[]', space=smem, size = 0x4, offset = 0x4, fixed_abs, tag = 'smem constant byte address 0x4 - core index']
  #allocation1 [shape = 'u32[144,128]{1,0:T(1,128)}', space=vmem, size = 0x12000, scoped, tag = 'internal scratch']
  %s0 = inlined_call_operand.vmem [shape: bf16[32,256], index: 0, kind: input, shape index: {}]
  %s1 = inlined_call_operand.vmem [shape: f32[1,256], index: 1, kind: input, shape index: {}]
  %s2 = inlined_call_operand.vmem [shape: f32[1,256], index: 2, kind: input, shape index: {}]
  %s3 = inlined_call_operand.vmem [shape: bf16[256,128], index: 3, kind: input, shape index: {}]
  %s4 = inlined_call_operand.vmem [shape: f32[1,128], index: 4, kind: input, shape index: {}]
  %s5 = inlined_call_operand.vmem [shape: f32[32,128], index: 5, kind: output, shape index: {}]
  %s6 = sld [smem:[#allocation0]]
  $region30: #{_projection_mlp_forward.3} parent=0
    _
  %s8 = ssub.s32 1, %s6
  %s9 = scalar_select 0, %s8, %s6
  // Predicated region
  $region2: #{_projection_mlp_forward.3} parent=0 // pred_check
    _
  $region3: #{_projection_mlp_forward.3} parent=0 // pred_check_branch
    %11 = sbr.rel (0) target = $region5
  $region4: #{_projection_mlp_forward.3} parent=0 // pred_region
    _
  $region5: #{_projection_mlp_forward.3} parent=0 // pred_fallthru
    _
  // Predicated region
  $region6: #{_projection_mlp_forward.3} parent=0 // pred_check
    _
  $region7: #{_projection_mlp_forward.3} parent=0 // pred_check_branch
    %13 = sbr.rel (0) target = $region9
  $region8: #{_projection_mlp_forward.3} parent=0 // pred_region
    _
  $region9: #{_projection_mlp_forward.3} parent=0 // pred_fallthru
    _
  // Predicated region
  $region10: #{_projection_mlp_forward.3} parent=0 // pred_check
    _
  $region11: #{_projection_mlp_forward.3} parent=0 // pred_check_branch
    %15 = sbr.rel (0) target = $region13
  $region12: #{_projection_mlp_forward.3} parent=0 // pred_region
    _
  $region13: #{_projection_mlp_forward.3} parent=0 // pred_fallthru
    _
  // Predicated region
  $region14: #{_projection_mlp_forward.3} parent=0 // pred_check
    _
  $region15: #{_projection_mlp_forward.3} parent=0 // pred_check_branch
    %17 = sbr.rel (0) target = $region17
  $region16: #{_projection_mlp_forward.3} parent=0 // pred_region
    _
  $region17: #{_projection_mlp_forward.3} parent=0 // pred_fallthru
    _
  // Predicated region
  $region18: #{_projection_mlp_forward.3} parent=0 // pred_check
    _
  $region19: #{_projection_mlp_forward.3} parent=0 // pred_check_branch
    %19 = sbr.rel (0) target = $region21
  $region20: #{_projection_mlp_forward.3} parent=0 // pred_region
    _
  $region21: #{_projection_mlp_forward.3} parent=0 // pred_fallthru
    _
  %v21 = vld [vmem:[%s0] sm:$0xff]
  %v22 = vld [vmem:[%s0 + $0x8] sm:$0xff]
  %v23 = vld [vmem:[%s0 + $0x10] sm:$0xff]
  %v24 = vld [vmem:[%s0 + $0x18] sm:$0xff]
  %v25 = vunpack.c.l.bf16 %v21
  %v26 = vunpack.c.h.bf16 %v21
  %v27 = vunpack.c.l.bf16 %v22
  %v28 = vunpack.c.h.bf16 %v22
  %v29 = vunpack.c.l.bf16 %v23
  %v30 = vunpack.c.h.bf16 %v23
  %v31 = vunpack.c.l.bf16 %v24
  %v32 = vunpack.c.h.bf16 %v24
  %v33 = vld [vmem:[%s1] sm:$0x3]
  %v35 = vlaneseq
  %v36 = vshrl.u32 %v35, 7
  %v37 = vsub.s32 0, %v36
  %v38 = vrot.slane %v33, %v37
  %v39 = vlaneseq
  %v40 = vshrl.u32 %v39, 7
  %v41 = vsub.s32 1, %v40
  %v42 = vrot.slane %v33, %v41
  %v45 = vmul.f32 %v25, %v38
  %v46 = vmul.f32 %v26, %v42
  %v47 = vmul.f32 %v27, %v38
  %v48 = vmul.f32 %v28, %v42
  %v49 = vmul.f32 %v29, %v38
  %v50 = vmul.f32 %v30, %v42
  %v51 = vmul.f32 %v31, %v38
  %v52 = vmul.f32 %v32, %v42
  %v53 = vld [vmem:[%s2] sm:$0x3]
  %v55 = vlaneseq
  %v56 = vshrl.u32 %v55, 7
  %v57 = vsub.s32 0, %v56
  %v58 = vrot.slane %v53, %v57
  %v59 = vlaneseq
  %v60 = vshrl.u32 %v59, 7
  %v61 = vsub.s32 1, %v60
  %v62 = vrot.slane %v53, %v61
  %v65 = vadd.f32 %v45, %v58
  %v66 = vadd.f32 %v46, %v62
  %v67 = vadd.f32 %v47, %v58
  %v68 = vadd.f32 %v48, %v62
  %v69 = vadd.f32 %v49, %v58
  %v70 = vadd.f32 %v50, %v62
  %v71 = vadd.f32 %v51, %v58
  %v72 = vadd.f32 %v52, %v62
  %v73 = vmax.f32 %v65, 0.0
  %v74 = vmax.f32 %v66, 0.0
  %v75 = vmax.f32 %v67, 0.0
  %v76 = vmax.f32 %v68, 0.0
  %v77 = vmax.f32 %v69, 0.0
  %v78 = vmax.f32 %v70, 0.0
  %v79 = vmax.f32 %v71, 0.0
  %v80 = vmax.f32 %v72, 0.0
  %v81 = vpack.c.bf16 %v75, %v73
  %v82 = vpack.c.bf16 %v76, %v74
  %v83 = vpack.c.bf16 %v79, %v77
  %v84 = vpack.c.bf16 %v80, %v78
  %v85 = vld [vmem:[%s3] sm:$0xf]
  %v86 = vld [vmem:[%s3 + $0x4] sm:$0xf]
  %v87 = vld [vmem:[%s3 + $0x8] sm:$0xf]
  %v88 = vld [vmem:[%s3 + $0xc] sm:$0xf]
  %v89 = vld [vmem:[%s3 + $0x10] sm:$0xf]
  %v90 = vld [vmem:[%s3 + $0x14] sm:$0xf]
  %v91 = vld [vmem:[%s3 + $0x18] sm:$0xf]
  %v92 = vld [vmem:[%s3 + $0x1c] sm:$0xf]
  %v93 = vld [vmem:[%s3 + $0x20] sm:$0xf]
  %v94 = vld [vmem:[%s3 + $0x24] sm:$0xf]
  %v95 = vld [vmem:[%s3 + $0x28] sm:$0xf]
  %v96 = vld [vmem:[%s3 + $0x2c] sm:$0xf]
  %v97 = vld [vmem:[%s3 + $0x30] sm:$0xf]
  %v98 = vld [vmem:[%s3 + $0x34] sm:$0xf]
  %v99 = vld [vmem:[%s3 + $0x38] sm:$0xf]
  %v100 = vld [vmem:[%s3 + $0x3c] sm:$0xf]
  %v101 = vld [vmem:[%s3 + $0x40] sm:$0xf]
  %v102 = vld [vmem:[%s3 + $0x44] sm:$0xf]
  %v103 = vld [vmem:[%s3 + $0x48] sm:$0xf]
  %v104 = vld [vmem:[%s3 + $0x4c] sm:$0xf]
  %v105 = vld [vmem:[%s3 + $0x50] sm:$0xf]
  %v106 = vld [vmem:[%s3 + $0x54] sm:$0xf]
  %v107 = vld [vmem:[%s3 + $0x58] sm:$0xf]
  %v108 = vld [vmem:[%s3 + $0x5c] sm:$0xf]
  %v109 = vld [vmem:[%s3 + $0x60] sm:$0xf]
  %v110 = vld [vmem:[%s3 + $0x64] sm:$0xf]
  %v111 = vld [vmem:[%s3 + $0x68] sm:$0xf]
  %v112 = vld [vmem:[%s3 + $0x6c] sm:$0xf]
  %v113 = vld [vmem:[%s3 + $0x70] sm:$0xf]
  %v114 = vld [vmem:[%s3 + $0x74] sm:$0xf]
  %v115 = vld [vmem:[%s3 + $0x78] sm:$0xf]
  %v116 = vld [vmem:[%s3 + $0x7c] sm:$0xf]
  %v117 = vld [vmem:[%s4] sm:$0x1]
  %v119 = vlaneseq
  %v120 = vshrl.u32 %v119, 7
  %v121 = vsub.s32 0, %v120
  %v122 = vrot.slane %v117, %v121
  %v156 = vunpack.c.l.b16 %v85
  %v157 = vunpack.c.l.b16 %v86
  %v158 = vunpack.c.l.b16 %v87
  %v159 = vunpack.c.l.b16 %v88
  %v160 = vunpack.c.l.b16 %v89
  %v161 = vunpack.c.l.b16 %v90
  %v162 = vunpack.c.l.b16 %v91
  %v163 = vunpack.c.l.b16 %v92
  %v164 = vunpack.c.l.b16 %v93
  %v165 = vunpack.c.l.b16 %v94
  %v166 = vunpack.c.l.b16 %v95
  %v167 = vunpack.c.l.b16 %v96
  %v168 = vunpack.c.l.b16 %v97
  %v169 = vunpack.c.l.b16 %v98
  %v170 = vunpack.c.l.b16 %v99
  %v171 = vunpack.c.l.b16 %v100
  %v172 = vunpack.c.l.b16 %v101
  %v173 = vunpack.c.l.b16 %v102
  %v174 = vunpack.c.l.b16 %v103
  %v175 = vunpack.c.l.b16 %v104
  %v176 = vunpack.c.l.b16 %v105
  %v177 = vunpack.c.l.b16 %v106
  %v178 = vunpack.c.l.b16 %v107
  %v179 = vunpack.c.l.b16 %v108
  %v180 = vunpack.c.l.b16 %v109
  %v181 = vunpack.c.l.b16 %v110
  %v182 = vunpack.c.l.b16 %v111
  %v183 = vunpack.c.l.b16 %v112
  %v184 = vunpack.c.l.b16 %v113
  %v185 = vunpack.c.l.b16 %v114
  %v186 = vunpack.c.l.b16 %v115
  %v187 = vunpack.c.l.b16 %v116
  %v188 = vpack.c.b16 %v157, %v156
  %v189 = vpack.c.b16 %v159, %v158
  %v190 = vpack.c.b16 %v161, %v160
  %v191 = vpack.c.b16 %v163, %v162
  %v192 = vpack.c.b16 %v165, %v164
  %v193 = vpack.c.b16 %v167, %v166
  %v194 = vpack.c.b16 %v169, %v168
  %v195 = vpack.c.b16 %v171, %v170
  %v196 = vpack.c.b16 %v173, %v172
  %v197 = vpack.c.b16 %v175, %v174
  %v198 = vpack.c.b16 %v177, %v176
  %v199 = vpack.c.b16 %v179, %v178
  %v200 = vpack.c.b16 %v181, %v180
  %v201 = vpack.c.b16 %v183, %v182
  %v202 = vpack.c.b16 %v185, %v184
  %v203 = vpack.c.b16 %v187, %v186
  %220 = vmatprep.subr.bf16.mxu0 0
  %221 = vmatpush1.bf16.msra.mxu0 %v195
  %222 = vmatprep.subr.bf16.mxu0 0
  %223 = vmatpush1.bf16.msra.mxu0 %v194
  %224 = vmatprep.subr.bf16.mxu0 0
  %225 = vmatpush1.bf16.msra.mxu0 %v193
  %226 = vmatprep.subr.bf16.mxu0 0
  %227 = vmatpush1.bf16.msra.mxu0 %v192
  %228 = vmatprep.subr.bf16.mxu0 0
  %229 = vmatpush1.bf16.msra.mxu0 %v191
  %230 = vmatprep.subr.bf16.mxu0 0
  %231 = vmatpush1.bf16.msra.mxu0 %v190
  %232 = vmatprep.subr.bf16.mxu0 0
  %233 = vmatpush1.bf16.msra.mxu0 %v189
  %234 = vmatprep.subr.bf16.mxu0 0
  %235 = vmatpush1.bf16.msra.mxu0 %v188
  %236 = vmatprep.subr.bf16.mxu0 0
  %237 = vmatpush2.bf16.msra.mxu0 %v203
  %238 = vmatprep.subr.bf16.mxu0 0
  %239 = vmatpush2.bf16.msra.mxu0 %v202
  %240 = vmatprep.subr.bf16.mxu0 0
  %241 = vmatpush2.bf16.msra.mxu0 %v201
  %242 = vmatprep.subr.bf16.mxu0 0
  %243 = vmatpush2.bf16.msra.mxu0 %v200
  %244 = vmatprep.subr.bf16.mxu0 0
  %245 = vmatpush2.bf16.msra.mxu0 %v199
  %246 = vmatprep.subr.bf16.mxu0 0
  %247 = vmatpush2.bf16.msra.mxu0 %v198
  %248 = vmatprep.subr.bf16.mxu0 0
  %249 = vmatpush2.bf16.msra.mxu0 %v197
  %250 = vmatprep.subr.bf16.mxu0 0
  %251 = vmatpush2.bf16.msra.mxu0 %v196
  %252 = vmatprep.mubr.bf16.mxu0 %v82
  %253 = vmatmul.mubr.bf16.gmra.mxu0 %v81
  %v254 = vpop.f32.mrf.mxu0
  %v255 = vadd.f32 %v122, %v254
  %v256 = vpop.f32.mrf.mxu0
  %v257 = vpop.f32.mrf.mxu0
  %v258 = vadd.f32 %v122, %v257
  %v259 = vpop.f32.mrf.mxu0
  %260 = vmatprep.mubr.bf16.mxu0 %v84
  %261 = vmatmul.mubr.bf16.gmra.mxu0 %v83
  %v262 = vpop.f32.mrf.mxu0
  %v263 = vadd.f32 %v122, %v262
  %v264 = vpop.f32.mrf.mxu0
  %v265 = vpop.f32.mrf.mxu0
  %v266 = vadd.f32 %v122, %v265
  %v267 = vpop.f32.mrf.mxu0
  %268 = vdwg.mxu0
  %269 = vst [vmem:[%s5] sm:$0xff] %v255
  %270 = vst [vmem:[%s5 + $0x8] sm:$0xff] %v258
  %271 = vst [vmem:[%s5 + $0x10] sm:$0xff] %v263
  %272 = vst [vmem:[%s5 + $0x18] sm:$0xff] %v266
  // Predicated region
  $region22: #{_projection_mlp_forward.3} parent=0 // pred_check
    _
  $region23: #{_projection_mlp_forward.3} parent=0 // pred_check_branch
    %274 = sbr.rel (0) target = $region25
  $region24: #{_projection_mlp_forward.3} parent=0 // pred_region
    _
  $region25: #{_projection_mlp_forward.3} parent=0 // pred_fallthru
    _
  // Predicated region
  $region26: #{_projection_mlp_forward.3} parent=0 // pred_check
    _
  $region27: #{_projection_mlp_forward.3} parent=0 // pred_check_branch
    %276 = sbr.rel (0) target = $region29
  $region28: #{_projection_mlp_forward.3} parent=0 // pred_region
    _
  $region29: #{_projection_mlp_forward.3} parent=0 // pred_fallthru
    _

</llo_original>
